<compile_context>
chip_gen: v5e
topology: v5e:2x2
jax: 0.10.0
libtpu: 0.0.40
codegen_flags: <defaults>
</compile_context>

<pallas_src>
import jax
import jax.numpy as jnp
from jax.experimental import pallas as pl
from jax.experimental.pallas import tpu as pltpu


def charm_kernel(x_ref, consts_ref, out_ref):
    # x_ref     : (B, A, L)                      raw input
    # consts_ref: (3L + 3 + pad + C*D, C*D) f32  packed batch-independent constants:
    #   rows [0,  L)  : (w0+w1+w2) lane-tiled C times
    #   rows [L, 2L)  : w0 tiled
    #   rows [2L,3L)  : w2 tiled
    #   row   3L      : A*bias tiled
    #   row   3L+1    : s_c repeated D times     (value s_c[i] at lane i*D+j)
    #   row   3L+2    : nom = exp(s_c*s_w) flattened (C,D) -> (C*D,)
    #   rows [-CD:]   : seg, block-diag ones: seg[i*D+j, i'*D+j'] = (i == i')
    # out_ref   : (B, C*D)  lane-dense flat output; wrapper reshapes to (B, C, D)
    B, A, L = x_ref.shape
    CD = out_ref.shape[1]

    x = x_ref[...]                                   # (B, A, L) f32
    cs1 = jnp.sum(x, axis=1)                         # (B, L)  full column sum (tap k=1)
    x_last = x[:, A - 1, :]                          # (B, L)  row dropped by tap k=0
    x_first = x[:, 0, :]                             # (B, L)  row dropped by tap k=2

    wsum_t = consts_ref[0:L, :]                      # (L, CD)
    w0_t = consts_ref[L:2 * L, :]                    # (L, CD)
    w2_t = consts_ref[2 * L:3 * L, :]                # (L, CD)
    abias = consts_ref[3 * L:3 * L + 1, :]           # (1, CD)  A * bias (tiled)
    s_c = consts_ref[3 * L + 1:3 * L + 2, :]         # (1, CD)
    nom = consts_ref[3 * L + 2:3 * L + 3, :]         # (1, CD)
    seg = consts_ref[consts_ref.shape[0] - CD:, :]   # (CD, CD)

    # s_x_flat[b, i*D+j] = sum_a y[b, a, j] — already replicated across the C channel
    # segments because the weights were pre-tiled along lanes (no in-kernel tiling).
    s_x = (jnp.dot(cs1, wsum_t, preferred_element_type=jnp.float32)
           - jnp.dot(x_last, w0_t, preferred_element_type=jnp.float32)
           - jnp.dot(x_first, w2_t, preferred_element_type=jnp.float32)
           + abias)                                  # (B, CD)

    e = jnp.exp(s_c * s_x)                           # (B, CD)  EUP exp
    # den[b, i*D+j] = sum_{j'} e[b, i*D+j']  — segmented lane-sum, broadcast back over
    # each D-wide segment, done as one tiny MXU push (no XLU relayout / reshape).
    den = jnp.dot(e, seg, preferred_element_type=jnp.float32)   # (B, CD)
    out_ref[...] = nom * pl.reciprocal(den, approx=False)


def _pack_constants(conv_w_taps, conv_b, emb_w, A, C):
    """Build the single packed constants buffer (batch-independent, done once)."""
    L, D = conv_w_taps.shape[1], conv_w_taps.shape[2]
    CD = C * D
    w0, w1, w2 = conv_w_taps[0], conv_w_taps[1], conv_w_taps[2]

    tile_c = lambda m: jnp.tile(m, (1, C))                         # (L, D) -> (L, CD)
    s_c = jnp.sum(emb_w, axis=1)                                   # (C,)
    s_w = jnp.sum(emb_w, axis=0)                                   # (D,)
    nom = jnp.exp(s_c[:, None] * s_w[None, :])                     # (C, D)

    rows = [
        tile_c(w0 + w1 + w2),                                      # (L, CD)
        tile_c(w0),                                                # (L, CD)
        tile_c(w2),                                                # (L, CD)
        jnp.tile(A * conv_b, C)[None, :],                          # (1, CD)
        jnp.repeat(s_c, D)[None, :],                               # (1, CD)
        nom.reshape(1, CD),                                        # (1, CD)
    ]
    n = 3 * L + 3
    pad = (-n) % 8                                                 # keep seg 8-aligned
    if pad:
        rows.append(jnp.zeros((pad, CD), jnp.float32))
    rows.append(jnp.kron(jnp.eye(C, dtype=jnp.float32),
                         jnp.ones((D, D), jnp.float32)))           # (CD, CD) seg matrix
    return jnp.concatenate(rows, axis=0).astype(jnp.float32)


def charm_forward(x, conv_w, conv_b, emb_w):
    """x: (B, A, L) f32; conv_w: PyTorch Conv1d layout (D, L, 3); conv_b: (D,);
    emb_w: (C, D).  Returns (B, C, D)."""
    B, A, L = x.shape
    D = conv_w.shape[0]
    C = emb_w.shape[0]
    CD = C * D

    conv_w_taps = jnp.transpose(conv_w, (2, 1, 0))                 # (3, L, D) tap-major
    consts = _pack_constants(conv_w_taps, conv_b, emb_w, A, C)

    out_flat = pl.pallas_call(
        charm_kernel,
        out_shape=jax.ShapeDtypeStruct((B, CD), jnp.float32),
        in_specs=[
            pl.BlockSpec(memory_space=pltpu.MemorySpace.VMEM),     # x, whole array
            pl.BlockSpec(memory_space=pltpu.MemorySpace.VMEM),     # packed constants
        ],
        out_specs=pl.BlockSpec(memory_space=pltpu.MemorySpace.VMEM),
    )(x, consts)
    return out_flat.reshape(B, C, D)


def charm_ref(x, conv_w, conv_b, emb_w):
    """Pure-JAX reference: explicit padded conv + softreorder (no colsum collapse)."""
    B, A, L = x.shape
    w = jnp.transpose(conv_w, (2, 1, 0))                           # (3, L, D) tap-major
    hp = jax.lax.Precision.HIGHEST
    x_pad = jnp.pad(x, ((0, 0), (1, 1), (0, 0)))
    y = (jnp.einsum('bal,ld->bad', x_pad[:, 0:A],     w[0], precision=hp)
         + jnp.einsum('bal,ld->bad', x_pad[:, 1:A + 1], w[1], precision=hp)
         + jnp.einsum('bal,ld->bad', x_pad[:, 2:A + 2], w[2], precision=hp)
         + conv_b)                                                 # (B, A, D)
    s_c = jnp.sum(emb_w, axis=1)                                   # (C,)
    s_w = jnp.sum(emb_w, axis=0)                                   # (D,)
    s_x = jnp.sum(y, axis=1)                                       # (B, D)
    nom = jnp.exp(s_c[:, None] * s_w[None, :])                     # (C, D)
    den = jnp.sum(jnp.exp(s_c[None, :, None] * s_x[:, None, :]), axis=-1)  # (B, C)
    return nom[None] / den[:, :, None]                             # (B, C, D)


if __name__ == "__main__":
    # CHARM(dimension=D, channels=C, length=L) on x of shape (batch B, seq A, length L).
    B, A, L, D, C = 2, 8, 16, 32, 4

    key = jax.random.PRNGKey(0)
    k1, k2, k3, k4 = jax.random.split(key, 4)
    x      = jax.random.normal(k1, (B, A, L), jnp.float32) * 0.1
    conv_w = jax.random.normal(k2, (D, L, 3), jnp.float32) * 0.1   # PyTorch Conv1d layout
    conv_b = jax.random.normal(k3, (D,),      jnp.float32) * 0.1
    emb_w  = jax.random.normal(k4, (C, D),    jnp.float32) * 0.1

    charm = jax.jit(charm_forward)
    out = charm(x, conv_w, conv_b, emb_w)
    jax.block_until_ready(out)

    ref = charm_ref(x, conv_w, conv_b, emb_w)
    assert out.shape == (B, C, D), out.shape
    # Tolerance covers MXU f32 multi-pass emulation / summation-order differences
    # between the in-kernel matmuls and the HIGHEST-precision XLA reference.
    assert bool(jnp.allclose(out, ref, atol=1e-4, rtol=1e-4)), "mismatch vs reference"
    print("KERNEL_OK")
</pallas_src>

<mosaic_0001>
module attributes {stable_mosaic.version = 11 : i64} {
  func.func @charm_kernel(%arg0: memref<2x8x16xf32, #tpu.memory_space<vmem>>, %arg1: memref<184x128xf32, #tpu.memory_space<vmem>>, %arg2: memref<2x128xf32, #tpu.memory_space<vmem>>) attributes {dimension_semantics = [], scalar_prefetch = 0 : i64, scratch_operands = 0 : i64, tpu.core_type = #tpu.core_type<tc>} {
    %c0 = arith.constant 0 : index
    %c0_0 = arith.constant 0 : index
    %c0_1 = arith.constant 0 : index
    %0 = vector.load %arg0[%c0, %c0_0, %c0_1] : memref<2x8x16xf32, #tpu.memory_space<vmem>>, vector<2x8x16xf32>
    %cst = arith.constant dense<0.000000e+00> : vector<2x16xf32>
    %1 = vector.multi_reduction <add>, %0, %cst [1] : vector<2x8x16xf32> to vector<2x16xf32>
    %2 = vector.extract_strided_slice %0 {offsets = [0, 7, 0], sizes = [2, 1, 16], strides = [1, 1, 1]} : vector<2x8x16xf32> to vector<2x1x16xf32>
    %3 = vector.shape_cast %2 : vector<2x1x16xf32> to vector<2x16xf32>
    %4 = vector.extract_strided_slice %0 {offsets = [0, 0, 0], sizes = [2, 1, 16], strides = [1, 1, 1]} : vector<2x8x16xf32> to vector<2x1x16xf32>
    %5 = vector.shape_cast %4 : vector<2x1x16xf32> to vector<2x16xf32>
    %c0_2 = arith.constant 0 : index
    %c0_3 = arith.constant 0 : index
    %6 = vector.load %arg1[%c0_2, %c0_3] : memref<184x128xf32, #tpu.memory_space<vmem>>, vector<16x128xf32>
    %c16 = arith.constant 16 : index
    %c0_4 = arith.constant 0 : index
    %7 = vector.load %arg1[%c16, %c0_4] : memref<184x128xf32, #tpu.memory_space<vmem>>, vector<16x128xf32>
    %c32 = arith.constant 32 : index
    %c0_5 = arith.constant 0 : index
    %8 = vector.load %arg1[%c32, %c0_5] : memref<184x128xf32, #tpu.memory_space<vmem>>, vector<16x128xf32>
    %c48 = arith.constant 48 : index
    %c0_6 = arith.constant 0 : index
    %9 = vector.load %arg1[%c48, %c0_6] : memref<184x128xf32, #tpu.memory_space<vmem>>, vector<1x128xf32>
    %c49 = arith.constant 49 : index
    %c0_7 = arith.constant 0 : index
    %10 = vector.load %arg1[%c49, %c0_7] : memref<184x128xf32, #tpu.memory_space<vmem>>, vector<1x128xf32>
    %c50 = arith.constant 50 : index
    %c0_8 = arith.constant 0 : index
    %11 = vector.load %arg1[%c50, %c0_8] : memref<184x128xf32, #tpu.memory_space<vmem>>, vector<1x128xf32>
    %c56 = arith.constant 56 : index
    %c0_9 = arith.constant 0 : index
    %12 = vector.load %arg1[%c56, %c0_9] : memref<184x128xf32, #tpu.memory_space<vmem>>, vector<128x128xf32>
    %cst_10 = arith.constant dense<0.000000e+00> : vector<2x128xf32>
    %13 = tpu.matmul %1, %6, %cst_10 {dimension_numbers = #tpu.dot_dimension_numbers<[1], [0], [0], [1], [0, 0, 1, 1], [], []>} : vector<2x16xf32>, vector<16x128xf32>, vector<2x128xf32> -> vector<2x128xf32>
    %cst_11 = arith.constant dense<0.000000e+00> : vector<2x128xf32>
    %14 = tpu.matmul %3, %7, %cst_11 {dimension_numbers = #tpu.dot_dimension_numbers<[1], [0], [0], [1], [0, 0, 1, 1], [], []>} : vector<2x16xf32>, vector<16x128xf32>, vector<2x128xf32> -> vector<2x128xf32>
    %15 = arith.subf %13, %14 : vector<2x128xf32>
    %cst_12 = arith.constant dense<0.000000e+00> : vector<2x128xf32>
    %16 = tpu.matmul %5, %8, %cst_12 {dimension_numbers = #tpu.dot_dimension_numbers<[1], [0], [0], [1], [0, 0, 1, 1], [], []>} : vector<2x16xf32>, vector<16x128xf32>, vector<2x128xf32> -> vector<2x128xf32>
    %17 = arith.subf %15, %16 : vector<2x128xf32>
    %18 = vector.broadcast %9 : vector<1x128xf32> to vector<2x128xf32>
    %19 = arith.addf %17, %18 : vector<2x128xf32>
    %20 = vector.broadcast %10 : vector<1x128xf32> to vector<2x128xf32>
    %21 = arith.mulf %20, %19 : vector<2x128xf32>
    %22 = math.exp %21 : vector<2x128xf32>
    %cst_13 = arith.constant dense<0.000000e+00> : vector<2x128xf32>
    %23 = tpu.matmul %22, %12, %cst_13 {dimension_numbers = #tpu.dot_dimension_numbers<[1], [0], [0], [1], [0, 0, 1, 1], [], []>} : vector<2x128xf32>, vector<128x128xf32>, vector<2x128xf32> -> vector<2x128xf32>
    %24 = tpu.reciprocal %23 : vector<2x128xf32> -> vector<2x128xf32>
    %25 = vector.broadcast %11 : vector<1x128xf32> to vector<2x128xf32>
    %26 = arith.mulf %25, %24 : vector<2x128xf32>
    %c0_14 = arith.constant 0 : index
    %c0_15 = arith.constant 0 : index
    %27 = vector.load %arg2[%c0_14, %c0_15] : memref<2x128xf32, #tpu.memory_space<vmem>>, vector<2x128xf32>
    tpu.vector_store %arg2[%c0_14, %c0_15], %26 {strides = array<i32>} : memref<2x128xf32, #tpu.memory_space<vmem>>, vector<2x128xf32>,
    return
  }
}

</mosaic_0001>

<llo_original>
// kernel: tile.26
$region0: #{tile.26}
  %s0 = inlined_call_operand.vmem [shape: f32[16,4,32], index: 0, kind: input, shape index: {}]
  %s1 = inlined_call_operand.vmem [shape: f32[16,128], index: 1, kind: output, shape index: {}]
  $region1: #{tile.26} parent=0
    #allocation0 [shape = 'u8[65536]{0}', space=vmem, size = 0x10000, scoped, tag = 'scoped mem for input reshape']
    %s3 = ssub.s32 16, 1
    %s4 = scalar_lea.vmem %s0, 60
    %v5 = vld [vmem:[%s4] sm:%s3]
    %s6 = scalar_lea.vmem [#allocation0], 120
    %7 = vst [vmem:[%s6] sm:%s3] %v5
    %s8 = scalar_lea.vmem %s0, 56
    %v9 = vld [vmem:[%s8] sm:%s3]
    %s10 = scalar_lea.vmem [#allocation0], 112
    %11 = vst [vmem:[%s10] sm:%s3] %v9
    %s12 = scalar_lea.vmem %s0, 52
    %v13 = vld [vmem:[%s12] sm:%s3]
    %s14 = scalar_lea.vmem [#allocation0], 104
    %15 = vst [vmem:[%s14] sm:%s3] %v13
    %s16 = scalar_lea.vmem %s0, 48
    %v17 = vld [vmem:[%s16] sm:%s3]
    %s18 = scalar_lea.vmem [#allocation0], 96
    %19 = vst [vmem:[%s18] sm:%s3] %v17
    %s20 = scalar_lea.vmem %s0, 44
    %v21 = vld [vmem:[%s20] sm:%s3]
    %s22 = scalar_lea.vmem [#allocation0], 88
    %23 = vst [vmem:[%s22] sm:%s3] %v21
    %s24 = scalar_lea.vmem %s0, 40
    %v25 = vld [vmem:[%s24] sm:%s3]
    %s26 = scalar_lea.vmem [#allocation0], 80
    %27 = vst [vmem:[%s26] sm:%s3] %v25
    %s28 = scalar_lea.vmem %s0, 36
    %v29 = vld [vmem:[%s28] sm:%s3]
    %s30 = scalar_lea.vmem [#allocation0], 72
    %31 = vst [vmem:[%s30] sm:%s3] %v29
    %s32 = scalar_lea.vmem %s0, 32
    %v33 = vld [vmem:[%s32] sm:%s3]
    %s34 = scalar_lea.vmem [#allocation0], 64
    %35 = vst [vmem:[%s34] sm:%s3] %v33
    %s36 = scalar_lea.vmem %s0, 28
    %v37 = vld [vmem:[%s36] sm:%s3]
    %s38 = scalar_lea.vmem [#allocation0], 56
    %39 = vst [vmem:[%s38] sm:%s3] %v37
    %s40 = scalar_lea.vmem %s0, 24
    %v41 = vld [vmem:[%s40] sm:%s3]
    %s42 = scalar_lea.vmem [#allocation0], 48
    %43 = vst [vmem:[%s42] sm:%s3] %v41
    %s44 = scalar_lea.vmem %s0, 20
    %v45 = vld [vmem:[%s44] sm:%s3]
    %s46 = scalar_lea.vmem [#allocation0], 40
    %47 = vst [vmem:[%s46] sm:%s3] %v45
    %s48 = scalar_lea.vmem %s0, 16
    %v49 = vld [vmem:[%s48] sm:%s3]
    %s50 = scalar_lea.vmem [#allocation0], 32
    %51 = vst [vmem:[%s50] sm:%s3] %v49
    %s52 = scalar_lea.vmem %s0, 12
    %v53 = vld [vmem:[%s52] sm:%s3]
    %s54 = scalar_lea.vmem [#allocation0], 24
    %55 = vst [vmem:[%s54] sm:%s3] %v53
    %s56 = scalar_lea.vmem %s0, 8
    %v57 = vld [vmem:[%s56] sm:%s3]
    %s58 = scalar_lea.vmem [#allocation0], 16
    %59 = vst [vmem:[%s58] sm:%s3] %v57
    %s60 = scalar_lea.vmem %s0, 4
    %v61 = vld [vmem:[%s60] sm:%s3]
    %s62 = scalar_lea.vmem [#allocation0], 8
    %63 = vst [vmem:[%s62] sm:%s3] %v61
    %v64 = vld [vmem:[%s0] sm:%s3]
    %65 = vst [vmem:[#allocation0] sm:%s3] %v64
    %v66 = vld [vmem:[#allocation0] ss:$8 sm:$0xf]
    %v67 = vld [vmem:[#allocation0] ss:$8 sm:$0xf0]
    %vm68 = vcmask 1047556
    %v69 = vsel %vm68, %v67, %v66
    %vm70 = vcmask 261120
    %71 = vst.msk [vmem:[%s1] sm:$0xff] %vm70, %v69
    %s72 = scalar_lea.vmem [#allocation0], 64
    %v73 = vld [vmem:[%s72] ss:$8 sm:$0xf]
    %s74 = scalar_lea.vmem [#allocation0], 64
    %v75 = vld [vmem:[%s74] ss:$8 sm:$0xf0]
    %vm76 = vcmask 1047556
    %v77 = vsel %vm76, %v75, %v73
    %vm78 = vcmask 261120
    %s79 = scalar_lea.vmem %s1, 8
    %80 = vst.msk [vmem:[%s79] sm:$0xff] %vm78, %v77
    %s81 = scalar_lea.vmem [#allocation0], 3
    %v82 = vld [vmem:[%s81] ss:$8 sm:$0xf]
    %s83 = scalar_lea.vmem [#allocation0], 3
    %v84 = vld [vmem:[%s83] ss:$8 sm:$0xf0]
    %vm85 = vcmask 1047556
    %v86 = vsel %vm85, %v84, %v82
    %87 = vrot.lane.b32.xlu0 %v86, 96
    %v88 = vpop.permute.xlu0 %87
    %vm89 = vcmask 1048320
    %90 = vst.msk [vmem:[%s1] sm:$0xff] %vm89, %v88
    %s91 = scalar_lea.vmem [#allocation0], 67
    %v92 = vld [vmem:[%s91] ss:$8 sm:$0xf]
    %s93 = scalar_lea.vmem [#allocation0], 67
    %v94 = vld [vmem:[%s93] ss:$8 sm:$0xf0]
    %vm95 = vcmask 1047556
    %v96 = vsel %vm95, %v94, %v92
    %97 = vrot.lane.b32.xlu0 %v96, 96
    %v98 = vpop.permute.xlu0 %97
    %vm99 = vcmask 1048320
    %s100 = scalar_lea.vmem %s1, 8
    %101 = vst.msk [vmem:[%s100] sm:$0xff] %vm99, %v98
    %s102 = scalar_lea.vmem [#allocation0], 2
    %v103 = vld [vmem:[%s102] ss:$8 sm:$0xf]
    %s104 = scalar_lea.vmem [#allocation0], 2
    %v105 = vld [vmem:[%s104] ss:$8 sm:$0xf0]
    %vm106 = vcmask 1047556
    %v107 = vsel %vm106, %v105, %v103
    %108 = vrot.lane.b32.xlu0 %v107, 64
    %v109 = vpop.permute.xlu0 %108
    %vm110 = vcmask 785920
    %111 = vst.msk [vmem:[%s1] sm:$0xff] %vm110, %v109
    %s112 = scalar_lea.vmem [#allocation0], 66
    %v113 = vld [vmem:[%s112] ss:$8 sm:$0xf]
    %s114 = scalar_lea.vmem [#allocation0], 66
    %v115 = vld [vmem:[%s114] ss:$8 sm:$0xf0]
    %vm116 = vcmask 1047556
    %v117 = vsel %vm116, %v115, %v113
    %118 = vrot.lane.b32.xlu0 %v117, 64
    %v119 = vpop.permute.xlu0 %118
    %vm120 = vcmask 785920
    %s121 = scalar_lea.vmem %s1, 8
    %122 = vst.msk [vmem:[%s121] sm:$0xff] %vm120, %v119
    %s123 = scalar_lea.vmem [#allocation0], 1
    %v124 = vld [vmem:[%s123] ss:$8 sm:$0xf]
    %s125 = scalar_lea.vmem [#allocation0], 1
    %v126 = vld [vmem:[%s125] ss:$8 sm:$0xf0]
    %vm127 = vcmask 1047556
    %v128 = vsel %vm127, %v126, %v124
    %129 = vrot.lane.b32.xlu0 %v128, 32
    %v130 = vpop.permute.xlu0 %129
    %vm131 = vcmask 523520
    %132 = vst.msk [vmem:[%s1] sm:$0xff] %vm131, %v130
    %s133 = scalar_lea.vmem [#allocation0], 65
    %v134 = vld [vmem:[%s133] ss:$8 sm:$0xf]
    %s135 = scalar_lea.vmem [#allocation0], 65
    %v136 = vld [vmem:[%s135] ss:$8 sm:$0xf0]
    %vm137 = vcmask 1047556
    %v138 = vsel %vm137, %v136, %v134
    %139 = vrot.lane.b32.xlu0 %v138, 32
    %v140 = vpop.permute.xlu0 %139
    %vm141 = vcmask 523520
    %s142 = scalar_lea.vmem %s1, 8
    %143 = vst.msk [vmem:[%s142] sm:$0xff] %vm141, %v140

// kernel: charm_forward.1
$region0: #{charm_forward.1}
  #allocation0 [shape = 'u32[]', space=smem, size = 0x4, offset = 0x4, fixed_abs, tag = 'smem constant byte address 0x4 - core index']
  #allocation1 [shape = 'u32[72,128]{1,0:T(1,128)}', space=vmem, size = 0x9000, scoped, tag = 'internal scratch']
  %s0 = inlined_call_operand.vmem [shape: f32[2,8,16], index: 0, kind: input, shape index: {}]
  %s1 = inlined_call_operand.vmem [shape: f32[184,128], index: 1, kind: input, shape index: {}]
  %s2 = inlined_call_operand.vmem [shape: f32[2,128], index: 2, kind: output, shape index: {}]
  %s3 = sld [smem:[#allocation0]]
  $region18: #{charm_forward.1} parent=0
    _
  %s5 = ssub.s32 1, %s3
  %s6 = scalar_select 0, %s5, %s3
  // Predicated region
  $region2: #{charm_forward.1} parent=0 // pred_check
    _
  $region3: #{charm_forward.1} parent=0 // pred_check_branch
    %8 = sbr.rel (0) target = $region5
  $region4: #{charm_forward.1} parent=0 // pred_region
    _
  $region5: #{charm_forward.1} parent=0 // pred_fallthru
    _
  // Predicated region
  $region6: #{charm_forward.1} parent=0 // pred_check
    _
  $region7: #{charm_forward.1} parent=0 // pred_check_branch
    %10 = sbr.rel (0) target = $region9
  $region8: #{charm_forward.1} parent=0 // pred_region
    _
  $region9: #{charm_forward.1} parent=0 // pred_fallthru
    _
  %v11 = vld [vmem:[%s0] sm:$0xff]
  %v12 = vld [vmem:[%s0 + $0x8] sm:$0xff]
  %vm13 = vcmask 130048
  %v14 = vsel %vm13, %v11, 0.0
  %v15 = vrot.slane %v14, 4
  %v16 = vadd.f32 %v14, %v15
  %v17 = vrot.slane %v16, 2
  %v18 = vadd.f32 %v16, %v17
  %v19 = vrot.slane %v18, 1
  %v20 = vadd.f32 %v18, %v19
  %v21 = vsel %vm13, %v12, 0.0
  %v22 = vrot.slane %v21, 4
  %v23 = vadd.f32 %v21, %v22
  %v24 = vrot.slane %v23, 2
  %v25 = vadd.f32 %v23, %v24
  %v26 = vrot.slane %v25, 1
  %v27 = vadd.f32 %v25, %v26
  %v28 = vld [vmem:[%s1] sm:$0xff]
  %v29 = vld [vmem:[%s1 + $0x8] sm:$0xff]
  %v30 = vld [vmem:[%s1 + $0x10] sm:$0xff]
  %v31 = vld [vmem:[%s1 + $0x18] sm:$0xff]
  %v32 = vld [vmem:[%s1 + $0x20] sm:$0xff]
  %v33 = vld [vmem:[%s1 + $0x28] sm:$0xff]
  %v34 = vld [vmem:[%s1 + $0x30] sm:$0x1]
  %v35 = vld [vmem:[%s1 + $0x31] sm:$0x1]
  %v36 = vld [vmem:[%s1 + $0x32] sm:$0x1]
  %v37 = vld [vmem:[%s1 + $0x38] sm:$0xff]
  %v38 = vld [vmem:[%s1 + $0x40] sm:$0xff]
  %v39 = vld [vmem:[%s1 + $0x48] sm:$0xff]
  %v40 = vld [vmem:[%s1 + $0x50] sm:$0xff]
  %v41 = vld [vmem:[%s1 + $0x58] sm:$0xff]
  %v42 = vld [vmem:[%s1 + $0x60] sm:$0xff]
  %v43 = vld [vmem:[%s1 + $0x68] sm:$0xff]
  %v44 = vld [vmem:[%s1 + $0x70] sm:$0xff]
  %v45 = vld [vmem:[%s1 + $0x78] sm:$0xff]
  %v46 = vld [vmem:[%s1 + $0x80] sm:$0xff]
  %v47 = vld [vmem:[%s1 + $0x88] sm:$0xff]
  %v48 = vld [vmem:[%s1 + $0x90] sm:$0xff]
  %v49 = vld [vmem:[%s1 + $0x98] sm:$0xff]
  %v50 = vld [vmem:[%s1 + $0xa0] sm:$0xff]
  %v51 = vld [vmem:[%s1 + $0xa8] sm:$0xff]
  %v52 = vld [vmem:[%s1 + $0xb0] sm:$0xff]
  %vm55 = vcmask 1041409
  %v56 = vsel %vm55, %v27, %v20
  %v57 = vsel %vm13, %v56, 0
  %59 = vmatpush.msra.mxu0 0.0
  %60 = vmatpush.msra.mxu0 0.0
  %61 = vmatpush.msra.mxu0 0.0
  %62 = vmatpush.msra.mxu0 0.0
  %63 = vmatpush.msra.mxu0 0.0
  %64 = vmatpush.msra.mxu0 0.0
  %65 = vmatpush.msra.mxu0 0.0
  %66 = vmatpush.msra.mxu0 0.0
  %67 = vmatpush.msra.mxu0 0.0
  %68 = vmatpush.msra.mxu0 0.0
  %69 = vmatpush.msra.mxu0 0.0
  %70 = vmatpush.msra.mxu0 0.0
  %71 = vmatpush.msra.mxu0 0.0
  %72 = vmatpush.msra.mxu0 0.0
  %73 = vmatpush.msra.mxu0 %v29
  %74 = vmatpush.msra.mxu0 %v28
  %75 = vmatmul.f32.gmra.mxu0 %v57
  %v76 = vpop.f32.mrf.mxu0
  %v77 = vadd.f32 0.0, %v76
  %78 = vdwg.mxu0
  %v81 = vrot.slane %v11, 7
  %v82 = vrot.slane %v12, 6
  %v83 = vsel %vm55, %v82, %v81
  %v84 = vsel %vm13, %v83, 0
  %86 = vmatpush.msra.mxu0 0.0
  %87 = vmatpush.msra.mxu0 0.0
  %88 = vmatpush.msra.mxu0 0.0
  %89 = vmatpush.msra.mxu0 0.0
  %90 = vmatpush.msra.mxu0 0.0
  %91 = vmatpush.msra.mxu0 0.0
  %92 = vmatpush.msra.mxu0 0.0
  %93 = vmatpush.msra.mxu0 0.0
  %94 = vmatpush.msra.mxu0 0.0
  %95 = vmatpush.msra.mxu0 0.0
  %96 = vmatpush.msra.mxu0 0.0
  %97 = vmatpush.msra.mxu0 0.0
  %98 = vmatpush.msra.mxu0 0.0
  %99 = vmatpush.msra.mxu0 0.0
  %100 = vmatpush.msra.mxu0 %v31
  %101 = vmatpush.msra.mxu0 %v30
  %102 = vmatmul.f32.gmra.mxu0 %v84
  %v103 = vpop.f32.mrf.mxu0
  %v104 = vadd.f32 0.0, %v103
  %105 = vdwg.mxu0
  %v106 = vsub.f32 %v77, %v104
  %v107 = vrot.slane %v12, 7
  %v108 = vsel %vm55, %v107, %v11
  %v109 = vsel %vm13, %v108, 0
  %111 = vmatpush.msra.mxu0 0.0
  %112 = vmatpush.msra.mxu0 0.0
  %113 = vmatpush.msra.mxu0 0.0
  %114 = vmatpush.msra.mxu0 0.0
  %115 = vmatpush.msra.mxu0 0.0
  %116 = vmatpush.msra.mxu0 0.0
  %117 = vmatpush.msra.mxu0 0.0
  %118 = vmatpush.msra.mxu0 0.0
  %119 = vmatpush.msra.mxu0 0.0
  %120 = vmatpush.msra.mxu0 0.0
  %121 = vmatpush.msra.mxu0 0.0
  %122 = vmatpush.msra.mxu0 0.0
  %123 = vmatpush.msra.mxu0 0.0
  %124 = vmatpush.msra.mxu0 0.0
  %125 = vmatpush.msra.mxu0 %v33
  %126 = vmatpush.msra.mxu0 %v32
  %127 = vmatmul.f32.gmra.mxu0 %v109
  %v128 = vpop.f32.mrf.mxu0
  %v129 = vadd.f32 0.0, %v128
  %130 = vdwg.mxu0
  %v131 = vsub.f32 %v106, %v129
  %v132 = vperm.slane %v34, 0
  %v133 = vadd.f32 %v131, %v132
  %v134 = vperm.slane %v35, 0
  %v135 = vmul.f32 %v134, %v133
  %v136 = vmul.f32 %v135, 1.442695
  %v137 = vpow.pop %v136
  %138 = vmatpush.msra.mxu0 %v52
  %139 = vmatpush.msra.mxu0 %v51
  %140 = vmatpush.msra.mxu0 %v50
  %141 = vmatpush.msra.mxu0 %v49
  %142 = vmatpush.msra.mxu0 %v48
  %143 = vmatpush.msra.mxu0 %v47
  %144 = vmatpush.msra.mxu0 %v46
  %145 = vmatpush.msra.mxu0 %v45
  %146 = vmatpush.msra.mxu0 %v44
  %147 = vmatpush.msra.mxu0 %v43
  %148 = vmatpush.msra.mxu0 %v42
  %149 = vmatpush.msra.mxu0 %v41
  %150 = vmatpush.msra.mxu0 %v40
  %151 = vmatpush.msra.mxu0 %v39
  %152 = vmatpush.msra.mxu0 %v38
  %153 = vmatpush.msra.mxu0 %v37
  %154 = vmatmul.f32.gmra.mxu0 %v137
  %v155 = vpop.f32.mrf.mxu0
  %v156 = vadd.f32 0.0, %v155
  %157 = vdwg.mxu0
  %v158 = vrcp.pop %v156
  %v159 = vmul.f32 %v156, %v158
  %v160 = vsub.f32 1.0, %v159
  %v161 = vmul.f32 %v158, %v160
  %v162 = vadd.f32 %v158, %v161
  %vm163 = vweird.f32 %v156
  %vm164 = vweird.f32 %v158
  %vm165 = vmor %vm163, %vm164
  %v166 = vsel %vm165, %v158, %v162
  %v167 = vand.u32 2147483647, %v156
  %vm168 = vcmp.eq.f32.partialorder %v167, 8.507059e+37
  %v169 = vand.u32 %v156, 2147483648
  %v170 = vor.u32 1.1754944e-38, %v169
  %v171 = vsel %vm168, %v170, %v166
  %v172 = vperm.slane %v36, 0
  %v173 = vmul.f32 %v172, %v171
  %174 = vst [vmem:[%s2] sm:$0x3] %v173
  // Predicated region
  $region10: #{charm_forward.1} parent=0 // pred_check
    _
  $region11: #{charm_forward.1} parent=0 // pred_check_branch
    %176 = sbr.rel (0) target = $region13
  $region12: #{charm_forward.1} parent=0 // pred_region
    _
  $region13: #{charm_forward.1} parent=0 // pred_fallthru
    _
  // Predicated region
  $region14: #{charm_forward.1} parent=0 // pred_check
    _
  $region15: #{charm_forward.1} parent=0 // pred_check_branch
    %178 = sbr.rel (0) target = $region17
  $region16: #{charm_forward.1} parent=0 // pred_region
    _
  $region17: #{charm_forward.1} parent=0 // pred_fallthru
    _

</llo_original>
